<compile_context>
chip_gen: v7x
topology: tpu7x:2x2x1
jax: 0.10.0
libtpu: 0.0.40
codegen_flags: <defaults>
</compile_context>

<pallas_src>
import jax
import jax.numpy as jnp
from jax.experimental import pallas as pl
from jax.experimental.pallas import tpu as pltpu


_LANES = 128


def _sublane_multiple(dtype) -> int:
    """Min sublane tile for the dtype: f32 -> 8, bf16/f16 -> 16, int8/fp8 -> 32."""
    itemsize = jnp.dtype(dtype).itemsize
    return {4: 8, 2: 16, 1: 32}.get(itemsize, 8)


def _pick_defaults():
    """(tile_rows, num_partitions) tuned per TPU generation."""
    try:
        kind = jax.devices()[0].device_kind.lower()
    except Exception:  # pragma: no cover - defensive
        kind = ""
    if "v7" in kind or "7x" in kind:
        # Dual TensorCore + ~3.2 TB/s HBM: bigger blocks, shard across cores.
        # 8192 rows f32 = 4 MiB/input/buffer -> 16 MiB, under the 32 MiB scoped default.
        return 8192, 2
    # v5e / v6e (single TC): 4096 rows = 8 MiB of buffers, under v5e's 16 MiB default.
    return 4096, 1


def mse_loss(predicted, target, *, tile_rows=None, num_partitions=None,
             lanes=_LANES, chunk_rows=512):
    assert predicted.shape == target.shape, "shape mismatch"
    n_true = int(predicted.size)
    assert n_true > 0, "empty input"

    if tile_rows is None or num_partitions is None:
        d_tr, d_np = _pick_defaults()
        tile_rows = d_tr if tile_rows is None else tile_rows
        num_partitions = d_np if num_partitions is None else num_partitions

    p = predicted.reshape(-1)
    t = target.reshape(-1)

    # Pad only the sub-128 lane tail (zeros are sum-neutral); common NN shapes
    # (numel % 128 == 0) take the no-copy path.
    n_pad = (-n_true) % lanes
    if n_pad:
        p = jnp.pad(p, (0, n_pad))
        t = jnp.pad(t, (0, n_pad))
    rows = (n_true + n_pad) // lanes

    p2 = p.reshape(rows, lanes)
    t2 = t.reshape(rows, lanes)

    # dtype-dependent sublane rounding (f32:8, bf16:16, int8/fp8:32).
    sub = max(_sublane_multiple(p2.dtype), _sublane_multiple(t2.dtype))
    chunk = max(sub, (int(chunk_rows) // sub) * sub)

    rows_r = ((rows + sub - 1) // sub) * sub
    tr = min(int(tile_rows), rows_r)
    tr = ((tr + sub - 1) // sub) * sub

    n_tiles = pl.cdiv(rows, tr)
    n_part = max(1, min(int(num_partitions), n_tiles))
    inner = pl.cdiv(n_tiles, n_part)
    total_steps = n_part * inner

    # Compile-time facts baked into the kernel (no scalar prefetch needed).
    has_partial = (rows % tr) != 0
    last_full = n_tiles - 1 if has_partial else n_tiles   # tiles < last_full are full
    has_overshoot = total_steps > n_tiles
    n_full_chunks = tr // chunk
    tail_rows = tr - n_full_chunks * chunk                 # multiple of `sub` (>=8) or 0

    def kernel(p_ref, t_ref, o_ref, acc_ref):
        c = pl.program_id(0)          # partition index ("parallel")
        i = pl.program_id(1)          # tile index within partition ("arbitrary")
        tile_idx = c * inner + i      # global (unclamped) tile index

        @pl.when(i == 0)
        def _init():
            acc_ref[...] = jnp.zeros_like(acc_ref)

        def _accum(pv, tv):
            d = pv.astype(jnp.float32) - tv.astype(jnp.float32)
            sq = d * d
            r = sq.shape[0]
            # Pure VPU vreg adds: collapse sublane groups onto the (8,128) accumulator.
            acc_ref[...] += jnp.sum(sq.reshape(r // 8, 8, lanes), axis=0)

        def fast_path():
            # Interior (guaranteed-full) tiles: no mask work; chunked accumulation
            # keeps the live vreg set small (no wide reduction tree / spills).
            if n_full_chunks > 0:
                def body(ci, carry):
                    r0 = pl.multiple_of(ci * chunk, chunk)
                    _accum(p_ref[pl.ds(r0, chunk), :],
                           t_ref[pl.ds(r0, chunk), :])
                    return carry
                jax.lax.fori_loop(0, n_full_chunks, body, 0, unroll=True)
            if tail_rows > 0:
                r0 = n_full_chunks * chunk
                _accum(p_ref[pl.ds(r0, tail_rows), :],
                       t_ref[pl.ds(r0, tail_rows), :])

        def masked_path():
            # Final partial tile only: rows beyond `rows` are unspecified Pallas
            # block padding -> select them to zero before squaring/accumulating.
            bound = rows - tile_idx * tr          # per-tile scalar bound
            row_iota = jax.lax.broadcasted_iota(jnp.int32, (tr, lanes), 0)
            mask = row_iota < bound
            pv = p_ref[...].astype(jnp.float32)
            tv = t_ref[...].astype(jnp.float32)
            d = jnp.where(mask, pv - tv, jnp.float32(0.0))
            acc_ref[...] += jnp.sum((d * d).reshape(tr // 8, 8, lanes), axis=0)

        if has_partial or has_overshoot:
            if last_full > 0:
                pl.when(tile_idx < last_full)(fast_path)
            if has_partial:
                pl.when(tile_idx == n_tiles - 1)(masked_path)
            # tile_idx >= n_tiles (overshoot): compute skipped entirely.
        else:
            fast_path()

        @pl.when(i == inner - 1)
        def _finalize():
            # One cross-lane/sublane reduce per partition, only at the end.
            o_ref[...] = jnp.sum(acc_ref[...], axis=(0, 1), keepdims=True)

    def in_map(c, i):
        tile = c * inner + i
        if has_overshoot:
            # Clamp so overshoot steps DMA a valid block (compute is skipped).
            tile = jnp.minimum(tile, n_tiles - 1)
        return (tile, 0)

    partials = pl.pallas_call(
        kernel,
        out_shape=jax.ShapeDtypeStruct((n_part, 1), jnp.float32),
        grid_spec=pltpu.PrefetchScalarGridSpec(
            num_scalar_prefetch=0,
            grid=(n_part, inner),
            in_specs=[
                pl.BlockSpec((tr, lanes), in_map),
                pl.BlockSpec((tr, lanes), in_map),
            ],
            out_specs=pl.BlockSpec((1, 1), lambda c, i: (c, 0)),
            scratch_shapes=[pltpu.VMEM((8, lanes), jnp.float32)],
        ),
        compiler_params=pltpu.CompilerParams(
            dimension_semantics=("parallel", "arbitrary"),
        ),
    )(p2, t2)

    return jnp.sum(partials) / jnp.float32(n_true)


if __name__ == "__main__":
    key = jax.random.PRNGKey(0)
    k1, k2 = jax.random.split(key)

    # Main case: small NCHW-like shapes, as the module would receive (defaults).
    shape = (2, 4, 16, 16)
    predicted = jax.random.normal(k1, shape, dtype=jnp.float32)
    target = jax.random.normal(k2, shape, dtype=jnp.float32)
    mse = mse_loss(predicted, target)
    jax.block_until_ready(mse)
    ref = jnp.mean((predicted - target) ** 2)
    assert jnp.allclose(mse, ref, rtol=1e-5, atol=1e-6), (mse, ref)

    # Non-aligned numel: lane-tail pad + masked partial-tile path.
    k3, k4 = jax.random.split(k2)
    pa = jax.random.normal(k3, (3, 5, 300), dtype=jnp.float32)
    ta = jax.random.normal(k4, (3, 5, 300), dtype=jnp.float32)
    mse2 = mse_loss(pa, ta)
    jax.block_until_ready(mse2)
    ref2 = jnp.mean((pa - ta) ** 2)
    assert jnp.allclose(mse2, ref2, rtol=1e-5, atol=1e-6), (mse2, ref2)

    # Multi-tile + two partitions + chunked fast path + partial tile + overshoot skip.
    k5, k6 = jax.random.split(k4)
    pb = jax.random.normal(k5, (4, 4, 64, 64), dtype=jnp.float32)
    tb = jax.random.normal(k6, (4, 4, 64, 64), dtype=jnp.float32)
    mse3 = mse_loss(pb, tb, tile_rows=192, num_partitions=2, chunk_rows=64)
    jax.block_until_ready(mse3)
    ref3 = jnp.mean((pb - tb) ** 2)
    assert jnp.allclose(mse3, ref3, rtol=1e-5, atol=1e-6), (mse3, ref3)

    # bf16 inputs: native-dtype streaming with 16-sublane rounding, masked path.
    k7, k8 = jax.random.split(k6)
    pc = jax.random.normal(k7, (2, 3, 50, 70), dtype=jnp.bfloat16)
    tc = jax.random.normal(k8, (2, 3, 50, 70), dtype=jnp.bfloat16)
    mse4 = mse_loss(pc, tc)
    jax.block_until_ready(mse4)
    ref4 = jnp.mean((pc.astype(jnp.float32) - tc.astype(jnp.float32)) ** 2)
    assert jnp.allclose(mse4, ref4, rtol=1e-5, atol=1e-6), (mse4, ref4)

    print("KERNEL_OK")
</pallas_src>

<mosaic_0001>
module attributes {stable_mosaic.version = 11 : i64} {
  func.func @kernel(%arg0: i32, %arg1: i32, %arg2: memref<16x128xf32, #tpu.memory_space<vmem>>, %arg3: memref<16x128xf32, #tpu.memory_space<vmem>>, %arg4: memref<1x1xf32, #tpu.memory_space<vmem>>, %arg5: memref<8x128xf32, #tpu.memory_space<vmem>>) attributes {dimension_semantics = [#tpu.dimension_semantics<parallel>, #tpu.dimension_semantics<arbitrary>], iteration_bounds = array<i64: 1, 1>, scalar_prefetch = 0 : i64, scratch_operands = 1 : i64, tpu.core_type = #tpu.core_type<tc>, window_params = [{transform_indices = @transform_0, window_bounds = array<i64: 16, 128>}, {transform_indices = @transform_1, window_bounds = array<i64: 16, 128>}, {transform_indices = @transform_2, window_bounds = array<i64: 1, 1>}]} {
    %c0_i32 = arith.constant 0 : i32
    %0 = arith.cmpi eq, %arg1, %c0_i32 : i32
    %1 = arith.extui %0 : i1 to i32
    %c0_i32_0 = arith.constant 0 : i32
    %2 = arith.cmpi ne, %1, %c0_i32_0 : i32
    scf.if %2 {
      %cst_10 = arith.constant 0.000000e+00 : f32
      %15 = vector.broadcast %cst_10 : f32 to vector<8x128xf32>
      %c0_11 = arith.constant 0 : index
      %c0_12 = arith.constant 0 : index
      %16 = vector.load %arg5[%c0_11, %c0_12] : memref<8x128xf32, #tpu.memory_space<vmem>>, vector<8x128xf32>
      tpu.vector_store %arg5[%c0_11, %c0_12], %15 {strides = array<i32>} : memref<8x128xf32, #tpu.memory_space<vmem>>, vector<8x128xf32>,
    } else {
    }
    %c0 = arith.constant 0 : index
    %c0_1 = arith.constant 0 : index
    %3 = vector.load %arg2[%c0, %c0_1] : memref<16x128xf32, #tpu.memory_space<vmem>>, vector<16x128xf32>
    %c0_2 = arith.constant 0 : index
    %c0_3 = arith.constant 0 : index
    %4 = vector.load %arg3[%c0_2, %c0_3] : memref<16x128xf32, #tpu.memory_space<vmem>>, vector<16x128xf32>
    %5 = arith.subf %3, %4 : vector<16x128xf32>
    %6 = arith.mulf %5, %5 : vector<16x128xf32>
    %c0_4 = arith.constant 0 : index
    %c0_5 = arith.constant 0 : index
    %7 = vector.load %arg5[%c0_4, %c0_5] : memref<8x128xf32, #tpu.memory_space<vmem>>, vector<8x128xf32>
    %8 = vector.shape_cast %6 : vector<16x128xf32> to vector<2x8x128xf32>
    %cst = arith.constant dense<0.000000e+00> : vector<8x128xf32>
    %9 = vector.multi_reduction <add>, %8, %cst [0] : vector<2x8x128xf32> to vector<8x128xf32>
    %10 = arith.addf %7, %9 : vector<8x128xf32>
    %c0_6 = arith.constant 0 : index
    %c0_7 = arith.constant 0 : index
    %11 = vector.load %arg5[%c0_6, %c0_7] : memref<8x128xf32, #tpu.memory_space<vmem>>, vector<8x128xf32>
    tpu.vector_store %arg5[%c0_6, %c0_7], %10 {strides = array<i32>} : memref<8x128xf32, #tpu.memory_space<vmem>>, vector<8x128xf32>,
    %c0_i32_8 = arith.constant 0 : i32
    %12 = arith.cmpi eq, %arg1, %c0_i32_8 : i32
    %13 = arith.extui %12 : i1 to i32
    %c0_i32_9 = arith.constant 0 : i32
    %14 = arith.cmpi ne, %13, %c0_i32_9 : i32
    scf.if %14 {
      %c0_10 = arith.constant 0 : index
      %c0_11 = arith.constant 0 : index
      %15 = vector.load %arg5[%c0_10, %c0_11] : memref<8x128xf32, #tpu.memory_space<vmem>>, vector<8x128xf32>
      %16 = vector.shape_cast %15 : vector<8x128xf32> to vector<1x8x128xf32>
      %cst_12 = arith.constant dense<0.000000e+00> : vector<1xf32>
      %17 = vector.multi_reduction <add>, %16, %cst_12 [1, 2] : vector<1x8x128xf32> to vector<1xf32>
      %18 = vector.shape_cast %17 : vector<1xf32> to vector<1x1x1xf32>
      %19 = vector.extract %18[0, 0, 0] : f32 from vector<1x1x1xf32>
      %20 = vector.broadcast %19 : f32 to vector<1x1xf32>
      %c0_13 = arith.constant 0 : index
      %c0_14 = arith.constant 0 : index
      %21 = vector.load %arg4[%c0_13, %c0_14] : memref<1x1xf32, #tpu.memory_space<vmem>>, vector<1x1xf32>
      tpu.vector_store %arg4[%c0_13, %c0_14], %20 {strides = array<i32>} : memref<1x1xf32, #tpu.memory_space<vmem>>, vector<1x1xf32>,
    } else {
    }
    return
  }
  func.func @transform_0(%arg0: i32, %arg1: i32) -> (i32, i32) {
    %c1_i32 = arith.constant 1 : i32
    %0 = arith.muli %arg0, %c1_i32 : i32
    %1 = arith.addi %0, %arg1 : i32
    %c0_i32 = arith.constant 0 : i32
    %c0_i32_0 = arith.constant 0 : i32
    return %1, %c0_i32 : i32, i32
  }
  func.func @transform_1(%arg0: i32, %arg1: i32) -> (i32, i32) {
    %c1_i32 = arith.constant 1 : i32
    %0 = arith.muli %arg0, %c1_i32 : i32
    %1 = arith.addi %0, %arg1 : i32
    %c0_i32 = arith.constant 0 : i32
    %c0_i32_0 = arith.constant 0 : i32
    return %1, %c0_i32 : i32, i32
  }
  func.func @transform_2(%arg0: i32, %arg1: i32) -> (i32, i32) {
    %c0_i32 = arith.constant 0 : i32
    %c0_i32_0 = arith.constant 0 : i32
    return %arg0, %c0_i32 : i32, i32
  }
}

</mosaic_0001>

<llo_original>
// kernel: tpu_custom_call.1
$region0: #{tpu_custom_call.1}
  #allocation0 [shape = 'u32[]', space=smem, size = 0x4, offset = 0x4, fixed_abs, tag = 'smem constant byte address 0x4 - core index']
  #allocation1 [shape = 'u32[144,128]{1,0:T(1,128)}', space=vmem, size = 0x12000, scoped, tag = 'internal scratch']
  #allocation2 [shape = 'f32[8,128]{1,0:T(8,128)}', space=vmem, size = 0x1000, scoped, tag = 'scratch operand']
  %s0 = inlined_call_operand.hbm [shape: f32[16,128], index: 0, kind: input, shape index: {}]
  %s1 = inlined_call_operand.hbm [shape: f32[16,128], index: 1, kind: input, shape index: {}]
  %s2 = inlined_call_operand.hbm [shape: f32[1,1], index: 2, kind: output, shape index: {}]
  %s3 = sld [smem:[#allocation0]]
  $region34: #{tpu_custom_call.1} parent=0
    _
  %s5 = ssub.s32 1, %s3
  %s6 = scalar_select 0, %s5, %s3
  $region1: #{tpu_custom_call.1} parent=0
    #allocation3 [shape = 'u8[8192]{0}', space=vmem, size = 0x2000, scoped, tag = 'input window, operand 0, single buffered']
    #allocation4 [shape = 's32[1]{0}', space=sflag, size = 0x4, scoped, tag = 'scoped memory for tpu_custom_call.1']
    #allocation5 [shape = 's32[1]{0}', space=sflag, size = 0x4, scoped, tag = 'scoped memory for tpu_custom_call.1']
    #allocation6 [shape = 'u8[8192]{0}', space=vmem, size = 0x2000, scoped, tag = 'input window, operand 1, single buffered']
    #allocation7 [shape = 's32[1]{0}', space=sflag, size = 0x4, scoped, tag = 'scoped memory for tpu_custom_call.1']
    #allocation8 [shape = 'u8[512]{0}', space=vmem, size = 0x400, scoped, tag = 'output window, operand 0, single buffered']
    %7 = vsyncpa [#allocation4], 0
    %8 = vsyncpa [#allocation7], 0
    %9 = vsyncpa [#allocation5], 0
    // Predicated region
    $region2: #{tpu_custom_call.1} parent=1 // pred_check
      _
    $region3: #{tpu_custom_call.1} parent=1 // pred_check_branch
      %11 = sbr.rel (0) target = $region5
    $region4: #{tpu_custom_call.1} parent=1 // pred_region
      %s12 = sadd.s32 0, 0
      %s13 = smul.u32 2, %s12
      %s15 = ssub.s32 256, 256
      %16 = vsyncadd [#allocation4], %s15
      %s17 = smul.addr %s13, 128
      %s18 = scalar_lea.hbm %s0, %s17
      %s19 = sshll.u32 [#allocation3], 4
      %s20 = int_to_ptr.vmem [resolvable:$true] %s19
      %25 = dma.hbm_to_vmem [thread:$0]  %s18, 256, %s20, [#allocation4], 128, 128, 8
    $region5: #{tpu_custom_call.1} parent=1 // pred_fallthru
      _
    // Predicated region
    $region6: #{tpu_custom_call.1} parent=1 // pred_check
      _
    $region7: #{tpu_custom_call.1} parent=1 // pred_check_branch
      %27 = sbr.rel (0) target = $region9
    $region8: #{tpu_custom_call.1} parent=1 // pred_region
      %s28 = sadd.s32 0, 0
      %s29 = smul.u32 2, %s28
      %s31 = ssub.s32 256, 256
      %32 = vsyncadd [#allocation7], %s31
      %s33 = smul.addr %s29, 128
      %s34 = scalar_lea.hbm %s1, %s33
      %s35 = sshll.u32 [#allocation6], 4
      %s36 = int_to_ptr.vmem [resolvable:$true] %s35
      %41 = dma.hbm_to_vmem [thread:$0]  %s34, 256, %s36, [#allocation7], 128, 128, 8
    $region9: #{tpu_custom_call.1} parent=1 // pred_fallthru
      _
    // Predicated region
    $region10: #{tpu_custom_call.1} parent=1 // pred_check
      _
    $region11: #{tpu_custom_call.1} parent=1 // pred_check_branch
      %43 = sbr.rel (0) target = $region13
    $region12: #{tpu_custom_call.1} parent=1 // pred_region
      %44 = dma.done [#allocation4], 256
    $region13: #{tpu_custom_call.1} parent=1 // pred_fallthru
      _
    // Predicated region
    $region14: #{tpu_custom_call.1} parent=1 // pred_check
      _
    $region15: #{tpu_custom_call.1} parent=1 // pred_check_branch
      %46 = sbr.rel (0) target = $region17
    $region16: #{tpu_custom_call.1} parent=1 // pred_region
      %47 = dma.done [#allocation7], 256
    $region17: #{tpu_custom_call.1} parent=1 // pred_fallthru
      _
    %s48 = sadd.s32 0, 0
    %s49 = smul.u32 2, %s48
    %s50 = sadd.s32 0, 0
    %s51 = smul.u32 2, %s50
    %p52 = scmp.eq.s32.totalorder 0, 0
    // Predicated region
    $region18: #{tpu_custom_call.1} parent=1 // pred_check
      %p53 = pneg %p52
    $region19: #{tpu_custom_call.1} parent=1 // pred_check_branch
      %55 = sbr.rel (%p53) target = $region21
    $region20: #{tpu_custom_call.1} parent=1 // pred_region
      %56 = vst [vmem:[#allocation2] sm:$0xff] 0.0
    $region21: #{tpu_custom_call.1} parent=1 // pred_fallthru
      _
    %v57 = vld [vmem:[#allocation3] sm:$0xff]
    %v58 = vld [vmem:[#allocation3 + $0x8] sm:$0xff]
    %v59 = vld [vmem:[#allocation6] sm:$0xff]
    %v60 = vld [vmem:[#allocation6 + $0x8] sm:$0xff]
    %v61 = vsub.f32 %v57, %v59
    %v62 = vsub.f32 %v58, %v60
    %v63 = vmul.f32 %v61, %v61
    %v64 = vmul.f32 %v62, %v62
    %v65 = vld [vmem:[#allocation2] sm:$0xff]
    %v66 = vadd.f32 %v63, %v64
    %v67 = vadd.f32 %v65, %v66
    %68 = vst [vmem:[#allocation2] sm:$0xff] %v67
    // Predicated region
    $region22: #{tpu_custom_call.1} parent=1 // pred_check
      %p69 = pneg %p52
    $region23: #{tpu_custom_call.1} parent=1 // pred_check_branch
      %71 = sbr.rel (%p69) target = $region25
    $region24: #{tpu_custom_call.1} parent=1 // pred_region
      %v72 = vld [vmem:[#allocation2] sm:$0xff]
      %73 = vadd.xlane.f32.xlu0 %v72
      %v74 = vpop.xlane.xlu0 %73
      %v75 = vrot.slane %v74, 4
      %v76 = vadd.f32 %v74, %v75
      %v77 = vrot.slane %v76, 2
      %v78 = vadd.f32 %v76, %v77
      %v79 = vrot.slane %v78, 1
      %v80 = vadd.f32 %v78, %v79
      %s81 = vtos %v80
      %v82 = vstv %s81
      %vm83 = vcmask 0
      %84 = vst.msk [vmem:[#allocation8] sm:$0x1] %vm83, %v82
    $region25: #{tpu_custom_call.1} parent=1 // pred_fallthru
      _
    // Predicated region
    $region26: #{tpu_custom_call.1} parent=1 // pred_check
      _
    $region27: #{tpu_custom_call.1} parent=1 // pred_check_branch
      %86 = sbr.rel (0) target = $region29
    $region28: #{tpu_custom_call.1} parent=1 // pred_region
      %s88 = ssub.s32 16, 16
      %89 = vsyncadd [#allocation5], %s88
      %s91 = sshll.u32 [#allocation8], 4
      %s92 = int_to_ptr.vmem [resolvable:$true] %s91
      %94 = dma.vmem_to_hbm [thread:$0]  %s92, 16, %s2, [#allocation5]
    $region29: #{tpu_custom_call.1} parent=1 // pred_fallthru
      _
    // Predicated region
    $region30: #{tpu_custom_call.1} parent=1 // pred_check
      _
    $region31: #{tpu_custom_call.1} parent=1 // pred_check_branch
      %96 = sbr.rel (0) target = $region33
    $region32: #{tpu_custom_call.1} parent=1 // pred_region
      %97 = dma.done [#allocation5], 16
    $region33: #{tpu_custom_call.1} parent=1 // pred_fallthru
      _
    %98 = vsyncpa [#allocation4], 1
    %99 = vsyncpa [#allocation7], 1
    %100 = vsyncpa [#allocation5], 1

</llo_original>
